<compile_context>
chip_gen: v7x
topology: tpu7x:2x2x1
jax: 0.10.0
libtpu: 0.0.40
codegen_flags: <defaults>
</compile_context>

<pallas_src>
import jax
import jax.numpy as jnp
from jax.experimental import pallas as pl
from jax.experimental.pallas import tpu as pltpu


def _round_up(x, m):
    return ((x + m - 1) // m) * m


def biasnet_kernel(x_ref,                     # (8, T)    bf16  batch tile (row 3 == 1)
                   w1_ref,                    # (64, 8)   bf16  (bias in column 3)
                   w2_ref, b2_ref,            # (128, 64) bf16, (128, 1) f32
                   w3_ref, b3_ref,            # (128, 1)  f32,  (1, 1)   f32
                   o_ref):                    # (1, T)    f32   lane-dense
    # Layer 1: Standardize + Linear(3,64) + BN1 + bias all folded into w1.
    # (64,8)@(8,T) on the MXU; the ones-row of x carries the bias column.
    h = jnp.dot(w1_ref[...], x_ref[...], preferred_element_type=jnp.float32)
    h = jnp.maximum(h, 0.0)                                     # (64, T)  f32

    # Layer 2: Linear(64,128) with BN2 folded in.  (128,64)@(64,T) on the MXU.
    h = jnp.dot(w2_ref[...], h.astype(jnp.bfloat16),
                preferred_element_type=jnp.float32)
    h = jnp.maximum(h + b2_ref[...], 0.0)                       # (128, T) f32

    # Layer 3: Linear(128,1) with DeStandardize folded in.
    # VPU multiply + sublane reduce; result is already lane-dense (1, T).
    o_ref[...] = jnp.sum(h * w3_ref[...], axis=0, keepdims=True) + b3_ref[...]


def _pick_tiling(n, max_tile_n):
    """Return (tile_n, grid, n_pad) with tile_n a multiple of 128, grid >= 2
    whenever the batch spans >= 2 lane blocks, and padding <= (grid-1)*128."""
    n_blocks = max(1, -(-n // 128))
    max_blocks = max(1, max_tile_n // 128)
    if n_blocks <= 1:
        grid = 1
    else:
        grid = max(2, -(-n_blocks // max_blocks))
    blocks_per_tile = -(-n_blocks // grid)
    tile_n = blocks_per_tile * 128
    return tile_n, grid, grid * tile_n


def biasnet_forward(x, folded, max_tile_n=8192):
    """x: (N, 3) f32.  folded: kernel-layout folded params.  Returns (N, 1) f32."""
    w1k, w2k, b2k, w3k, b3k = folded
    n = x.shape[0]
    tile_n, grid, n_pad = _pick_tiling(n, max_tile_n)

    # Transposed, feature-padded (3 -> 8) bf16 input: batch on the lane axis.
    # Row 3 is a constant 1 so the layer-1 bias rides in w1's column 3.
    x_aug = jnp.concatenate(
        [x.T.astype(jnp.bfloat16), jnp.ones((1, n), jnp.bfloat16)], axis=0)
    x_t = jnp.pad(x_aug, ((0, 4), (0, n_pad - n)))              # (8, n_pad)

    # Scoped VMEM budget: ~1 KB live per batch column (h1/h2 f32 + bf16 copy
    # + double-buffered x/out) with 2x margin for compiler temporaries,
    # plus resident weights.  Floor at the v5e default, cap under v7x physical.
    vmem_bytes = max(16 << 20, min(int(tile_n) * 2304 + (2 << 20), 48 << 20))

    resident = lambda i: (0, 0)              # weights: fetched once, stay resident
    out = pl.pallas_call(
        biasnet_kernel,
        out_shape=jax.ShapeDtypeStruct((1, n_pad), jnp.float32),
        grid=(grid,),
        in_specs=[
            pl.BlockSpec((8, tile_n), lambda i: (0, i)),   # x tile
            pl.BlockSpec((64, 8), resident),               # w1 (+ bias column)
            pl.BlockSpec((128, 64), resident),             # w2
            pl.BlockSpec((128, 1), resident),              # b2
            pl.BlockSpec((128, 1), resident),              # w3 (column)
            pl.BlockSpec((1, 1), resident),                # b3
        ],
        out_specs=pl.BlockSpec((1, tile_n), lambda i: (0, i)),
        compiler_params=pltpu.CompilerParams(
            dimension_semantics=("parallel",),
            vmem_limit_bytes=vmem_bytes),
    )(x_t, w1k, w2k, b2k, w3k, b3k)
    return out[0, :n].reshape(n, 1)


def make_raw_params(key):
    """PyTorch-layout parameters: Linear weight (out,in)/bias (out,); BN (f,)."""
    ks = jax.random.split(key, 14)

    def linear(kw, kb, fin, fout):
        bound = 1.0 / jnp.sqrt(fin)
        w = jax.random.uniform(kw, (fout, fin), jnp.float32, -bound, bound)
        b = jax.random.uniform(kb, (fout,), jnp.float32, -bound, bound)
        return w, b

    def bn(kg, kb, km, kv, f):
        gamma = 1.0 + 0.1 * jax.random.normal(kg, (f,), jnp.float32)
        beta = 0.1 * jax.random.normal(kb, (f,), jnp.float32)
        rmean = 0.1 * jax.random.normal(km, (f,), jnp.float32)
        rvar = jnp.abs(1.0 + 0.1 * jax.random.normal(kv, (f,), jnp.float32))
        return gamma, beta, rmean, rvar

    w1, b1 = linear(ks[0], ks[1], 3, 64)
    g1, be1, rm1, rv1 = bn(ks[2], ks[3], ks[4], ks[5], 64)
    w2, b2 = linear(ks[6], ks[7], 64, 128)
    g2, be2, rm2, rv2 = bn(ks[8], ks[9], ks[10], ks[11], 128)
    w3, b3 = linear(ks[12], ks[13], 128, 1)
    return (w1, b1, g1, be1, rm1, rv1, w2, b2, g2, be2, rm2, rv2, w3, b3)


def fold_params(raw, imean, istd, omean, ostd, eps=1e-5):
    """Fold Standardize / eval-mode BN / DeStandardize into the Linear layers
    and convert to the kernel's (transposed, bf16-MXU) layout.  Handles scalar
    or per-feature imean/istd."""
    (w1, b1, g1, be1, rm1, rv1,
     w2, b2, g2, be2, rm2, rv2, w3, b3) = raw

    imean = jnp.broadcast_to(jnp.asarray(imean, jnp.float32), (3,))
    istd = jnp.broadcast_to(jnp.asarray(istd, jnp.float32), (3,))
    omean = jnp.asarray(omean, jnp.float32)
    ostd = jnp.asarray(ostd, jnp.float32)

    # Standardize folded into layer 1: W1 @ ((x - imean)/istd) = (W1/istd) @ x + c
    w1f = w1 / istd[None, :]                                  # (64, 3)
    b1f = b1 - w1f @ imean                                    # (64,)
    # BN1 (eval) folded: s*z + t
    s1 = g1 / jnp.sqrt(rv1 + eps)
    t1 = be1 - rm1 * s1
    w1f = w1f * s1[:, None]
    b1f = b1f * s1 + t1

    # BN2 (eval) folded into layer 2
    s2 = g2 / jnp.sqrt(rv2 + eps)
    t2 = be2 - rm2 * s2
    w2f = w2 * s2[:, None]                                    # (128, 64)
    b2f = b2 * s2 + t2

    # DeStandardize folded into layer 3
    w3f = w3 * ostd                                           # (1, 128)
    b3f = b3 * ostd + omean                                   # (1,)

    # Kernel layouts: pad K 3->8 with the bias riding in column 3 (the host
    # feeds a constant-1 row there); bf16 for MXU operands; column biases.
    w1k = (jnp.zeros((64, 8), jnp.float32)
           .at[:, :3].set(w1f)
           .at[:, 3].set(b1f)).astype(jnp.bfloat16)               # (64, 8)
    w2k = w2f.astype(jnp.bfloat16)                                 # (128, 64)
    b2k = b2f.reshape(128, 1).astype(jnp.float32)
    w3k = w3f.reshape(128, 1).astype(jnp.float32)                  # column, f32 (VPU)
    b3k = b3f.reshape(1, 1).astype(jnp.float32)
    return (w1k, w2k, b2k, w3k, b3k)


def biasnet_reference(x, raw, imean, istd, omean, ostd, eps=1e-5):
    """Pure-JAX f32 replica of the PyTorch module (eval mode)."""
    (w1, b1, g1, be1, rm1, rv1,
     w2, b2, g2, be2, rm2, rv2, w3, b3) = raw
    h = (x - imean) / istd
    h = h @ w1.T + b1
    h = (h - rm1) / jnp.sqrt(rv1 + eps) * g1 + be1
    h = jnp.maximum(h, 0.0)
    h = h @ w2.T + b2
    h = (h - rm2) / jnp.sqrt(rv2 + eps) * g2 + be2
    h = jnp.maximum(h, 0.0)
    y = h @ w3.T + b3
    return y * ostd + omean


if __name__ == "__main__":
    key = jax.random.PRNGKey(0)
    kx, kx2, kp = jax.random.split(key, 3)

    imean, istd, omean, ostd = 0.5, 2.0, 1.0, 3.0
    raw = make_raw_params(kp)
    folded = fold_params(raw, imean, istd, omean, ostd)

    fwd = jax.jit(biasnet_forward)

    # Small demo batch (single grid step).
    N = 8
    x = jax.random.normal(kx, (N, 3), dtype=jnp.float32)
    out = jax.block_until_ready(fwd(x, folded))
    ref = biasnet_reference(x, raw, imean, istd, omean, ostd)
    assert out.shape == (N, 1), out.shape
    # bf16 MXU path -> slightly looser tolerance than pure f32.
    assert jnp.allclose(out, ref, atol=3e-2, rtol=3e-2), (out, ref)

    # Slightly larger batch to exercise the multi-step (grid >= 2) path.
    N2 = 300
    x2 = jax.random.normal(kx2, (N2, 3), dtype=jnp.float32)
    out2 = jax.block_until_ready(fwd(x2, folded))
    ref2 = biasnet_reference(x2, raw, imean, istd, omean, ostd)
    assert out2.shape == (N2, 1), out2.shape
    assert jnp.allclose(out2, ref2, atol=3e-2, rtol=3e-2), (out2, ref2)

    print("KERNEL_OK")
</pallas_src>

<mosaic_0001>
module attributes {stable_mosaic.version = 11 : i64} {
  func.func @biasnet_kernel(%arg0: i32, %arg1: memref<8x128xbf16, #tpu.memory_space<vmem>>, %arg2: memref<64x8xbf16, #tpu.memory_space<vmem>>, %arg3: memref<128x64xbf16, #tpu.memory_space<vmem>>, %arg4: memref<128x1xf32, #tpu.memory_space<vmem>>, %arg5: memref<128x1xf32, #tpu.memory_space<vmem>>, %arg6: memref<1x1xf32, #tpu.memory_space<vmem>>, %arg7: memref<1x128xf32, #tpu.memory_space<vmem>>) attributes {dimension_semantics = [#tpu.dimension_semantics<parallel>], iteration_bounds = array<i64: 1>, scalar_prefetch = 0 : i64, scratch_operands = 0 : i64, tpu.core_type = #tpu.core_type<tc>, window_params = [{transform_indices = @transform_0, window_bounds = array<i64: 8, 128>}, {pipeline_mode = #tpu.pipeline_mode<synchronous>, transform_indices = @transform_1, window_bounds = array<i64: 64, 8>}, {pipeline_mode = #tpu.pipeline_mode<synchronous>, transform_indices = @transform_2, window_bounds = array<i64: 128, 64>}, {pipeline_mode = #tpu.pipeline_mode<synchronous>, transform_indices = @transform_3, window_bounds = array<i64: 128, 1>}, {pipeline_mode = #tpu.pipeline_mode<synchronous>, transform_indices = @transform_4, window_bounds = array<i64: 128, 1>}, {pipeline_mode = #tpu.pipeline_mode<synchronous>, transform_indices = @transform_5, window_bounds = array<i64: 1, 1>}, {transform_indices = @transform_6, window_bounds = array<i64: 1, 128>}]} {
    %c0 = arith.constant 0 : index
    %c0_0 = arith.constant 0 : index
    %0 = vector.load %arg2[%c0, %c0_0] : memref<64x8xbf16, #tpu.memory_space<vmem>>, vector<64x8xbf16>
    %c0_1 = arith.constant 0 : index
    %c0_2 = arith.constant 0 : index
    %1 = vector.load %arg1[%c0_1, %c0_2] : memref<8x128xbf16, #tpu.memory_space<vmem>>, vector<8x128xbf16>
    %cst = arith.constant dense<0.000000e+00> : vector<64x128xf32>
    %2 = tpu.matmul %0, %1, %cst {dimension_numbers = #tpu.dot_dimension_numbers<[1], [0], [0], [1], [0, 0, 1, 1], [], []>} : vector<64x8xbf16>, vector<8x128xbf16>, vector<64x128xf32> -> vector<64x128xf32>
    %cst_3 = arith.constant 0.000000e+00 : f32
    %3 = vector.broadcast %cst_3 : f32 to vector<64x128xf32>
    %4 = arith.maximumf %2, %3 : vector<64x128xf32>
    %c0_4 = arith.constant 0 : index
    %c0_5 = arith.constant 0 : index
    %5 = vector.load %arg3[%c0_4, %c0_5] : memref<128x64xbf16, #tpu.memory_space<vmem>>, vector<128x64xbf16>
    %6 = arith.truncf %4 : vector<64x128xf32> to vector<64x128xbf16>
    %cst_6 = arith.constant dense<0.000000e+00> : vector<128x128xf32>
    %7 = tpu.matmul %5, %6, %cst_6 {dimension_numbers = #tpu.dot_dimension_numbers<[1], [0], [0], [1], [0, 0, 1, 1], [], []>} : vector<128x64xbf16>, vector<64x128xbf16>, vector<128x128xf32> -> vector<128x128xf32>
    %c0_7 = arith.constant 0 : index
    %c0_8 = arith.constant 0 : index
    %8 = vector.load %arg4[%c0_7, %c0_8] : memref<128x1xf32, #tpu.memory_space<vmem>>, vector<128x1xf32>
    %9 = vector.broadcast %8 : vector<128x1xf32> to vector<128x128xf32>
    %10 = arith.addf %7, %9 : vector<128x128xf32>
    %cst_9 = arith.constant 0.000000e+00 : f32
    %11 = vector.broadcast %cst_9 : f32 to vector<128x128xf32>
    %12 = arith.maximumf %10, %11 : vector<128x128xf32>
    %c0_10 = arith.constant 0 : index
    %c0_11 = arith.constant 0 : index
    %13 = vector.load %arg5[%c0_10, %c0_11] : memref<128x1xf32, #tpu.memory_space<vmem>>, vector<128x1xf32>
    %14 = vector.broadcast %13 : vector<128x1xf32> to vector<128x128xf32>
    %15 = arith.mulf %12, %14 : vector<128x128xf32>
    %cst_12 = arith.constant dense<0.000000e+00> : vector<128xf32>
    %16 = vector.multi_reduction <add>, %15, %cst_12 [0] : vector<128x128xf32> to vector<128xf32>
    %17 = vector.shape_cast %16 : vector<128xf32> to vector<1x128xf32>
    %c0_13 = arith.constant 0 : index
    %c0_14 = arith.constant 0 : index
    %18 = vector.load %arg6[%c0_13, %c0_14] : memref<1x1xf32, #tpu.memory_space<vmem>>, vector<1x1xf32>
    %19 = vector.broadcast %18 : vector<1x1xf32> to vector<1x128xf32>
    %20 = arith.addf %17, %19 : vector<1x128xf32>
    %c0_15 = arith.constant 0 : index
    %c0_16 = arith.constant 0 : index
    %21 = vector.load %arg7[%c0_15, %c0_16] : memref<1x128xf32, #tpu.memory_space<vmem>>, vector<1x128xf32>
    tpu.vector_store %arg7[%c0_15, %c0_16], %20 {strides = array<i32>} : memref<1x128xf32, #tpu.memory_space<vmem>>, vector<1x128xf32>,
    return
  }
  func.func @transform_0(%arg0: i32) -> (i32, i32) {
    %c0_i32 = arith.constant 0 : i32
    %c0_i32_0 = arith.constant 0 : i32
    return %c0_i32, %arg0 : i32, i32
  }
  func.func @transform_1(%arg0: i32) -> (i32, i32) {
    %c0_i32 = arith.constant 0 : i32
    %c0_i32_0 = arith.constant 0 : i32
    %c0_i32_1 = arith.constant 0 : i32
    return %c0_i32, %c0_i32_0 : i32, i32
  }
  func.func @transform_2(%arg0: i32) -> (i32, i32) {
    %c0_i32 = arith.constant 0 : i32
    %c0_i32_0 = arith.constant 0 : i32
    %c0_i32_1 = arith.constant 0 : i32
    return %c0_i32, %c0_i32_0 : i32, i32
  }
  func.func @transform_3(%arg0: i32) -> (i32, i32) {
    %c0_i32 = arith.constant 0 : i32
    %c0_i32_0 = arith.constant 0 : i32
    %c0_i32_1 = arith.constant 0 : i32
    return %c0_i32, %c0_i32_0 : i32, i32
  }
  func.func @transform_4(%arg0: i32) -> (i32, i32) {
    %c0_i32 = arith.constant 0 : i32
    %c0_i32_0 = arith.constant 0 : i32
    %c0_i32_1 = arith.constant 0 : i32
    return %c0_i32, %c0_i32_0 : i32, i32
  }
  func.func @transform_5(%arg0: i32) -> (i32, i32) {
    %c0_i32 = arith.constant 0 : i32
    %c0_i32_0 = arith.constant 0 : i32
    %c0_i32_1 = arith.constant 0 : i32
    return %c0_i32, %c0_i32_0 : i32, i32
  }
  func.func @transform_6(%arg0: i32) -> (i32, i32) {
    %c0_i32 = arith.constant 0 : i32
    %c0_i32_0 = arith.constant 0 : i32
    return %c0_i32, %arg0 : i32, i32
  }
}

</mosaic_0001>

<llo_original>
// kernel: biasnet_forward.1
$region0: #{biasnet_forward.1}
  #allocation0 [shape = 'u32[]', space=smem, size = 0x4, offset = 0x4, fixed_abs, tag = 'smem constant byte address 0x4 - core index']
  #allocation1 [shape = 'u32[144,128]{1,0:T(1,128)}', space=vmem, size = 0x12000, scoped, tag = 'internal scratch']
  #allocation2 [shape = 'f32[1,1]{1,0:T(1,128)S(1)}', space=vmem, size = 0x200, scoped, tag = 'scoped memory for biasnet_forward.1']
  %s0 = inlined_call_operand.vmem [shape: bf16[8,128], index: 0, kind: input, shape index: {}]
  %s1 = inlined_call_operand.vmem [shape: bf16[64,8], index: 1, kind: input, shape index: {}]
  %s2 = inlined_call_operand.vmem [shape: bf16[128,64], index: 2, kind: input, shape index: {}]
  %s3 = inlined_call_operand.vmem [shape: f32[128,1], index: 3, kind: input, shape index: {}]
  %s4 = inlined_call_operand.vmem [shape: f32[128,1], index: 4, kind: input, shape index: {}]
  %s5 = inlined_call_operand.<no memory space> [shape: f32[1,1], index: 5, kind: input, shape index: {}]
  %s6 = inlined_call_operand.vmem [shape: f32[1,128], index: 6, kind: output, shape index: {}]
  %s7 = sld [smem:[#allocation0]]
  $region34: #{biasnet_forward.1} parent=0
    _
  %s9 = ssub.s32 1, %s7
  %s10 = scalar_select 0, %s9, %s7
  %v11 = vstv %s5
  %12 = vst [vmem:[#allocation2] sm:$0x1] %v11
  // Predicated region
  $region2: #{biasnet_forward.1} parent=0 // pred_check
    _
  $region3: #{biasnet_forward.1} parent=0 // pred_check_branch
    %14 = sbr.rel (0) target = $region5
  $region4: #{biasnet_forward.1} parent=0 // pred_region
    _
  $region5: #{biasnet_forward.1} parent=0 // pred_fallthru
    _
  // Predicated region
  $region6: #{biasnet_forward.1} parent=0 // pred_check
    _
  $region7: #{biasnet_forward.1} parent=0 // pred_check_branch
    %16 = sbr.rel (0) target = $region9
  $region8: #{biasnet_forward.1} parent=0 // pred_region
    _
  $region9: #{biasnet_forward.1} parent=0 // pred_fallthru
    _
  // Predicated region
  $region10: #{biasnet_forward.1} parent=0 // pred_check
    _
  $region11: #{biasnet_forward.1} parent=0 // pred_check_branch
    %18 = sbr.rel (0) target = $region13
  $region12: #{biasnet_forward.1} parent=0 // pred_region
    _
  $region13: #{biasnet_forward.1} parent=0 // pred_fallthru
    _
  // Predicated region
  $region14: #{biasnet_forward.1} parent=0 // pred_check
    _
  $region15: #{biasnet_forward.1} parent=0 // pred_check_branch
    %20 = sbr.rel (0) target = $region17
  $region16: #{biasnet_forward.1} parent=0 // pred_region
    _
  $region17: #{biasnet_forward.1} parent=0 // pred_fallthru
    _
  // Predicated region
  $region18: #{biasnet_forward.1} parent=0 // pred_check
    _
  $region19: #{biasnet_forward.1} parent=0 // pred_check_branch
    %22 = sbr.rel (0) target = $region21
  $region20: #{biasnet_forward.1} parent=0 // pred_region
    _
  $region21: #{biasnet_forward.1} parent=0 // pred_fallthru
    _
  // Predicated region
  $region22: #{biasnet_forward.1} parent=0 // pred_check
    _
  $region23: #{biasnet_forward.1} parent=0 // pred_check_branch
    %24 = sbr.rel (0) target = $region25
  $region24: #{biasnet_forward.1} parent=0 // pred_region
    _
  $region25: #{biasnet_forward.1} parent=0 // pred_fallthru
    _
  %v26 = vld [vmem:[%s1] sm:$0xf]
  %v27 = vld [vmem:[%s1 + $0x4] sm:$0xf]
  %v28 = vld [vmem:[%s1 + $0x8] sm:$0xf]
  %v29 = vld [vmem:[%s1 + $0xc] sm:$0xf]
  %v30 = vld [vmem:[%s1 + $0x10] sm:$0xf]
  %v31 = vld [vmem:[%s1 + $0x14] sm:$0xf]
  %v32 = vld [vmem:[%s1 + $0x18] sm:$0xf]
  %v33 = vld [vmem:[%s1 + $0x1c] sm:$0xf]
  %v34 = vld [vmem:[%s0] sm:$0xf]
  %v43 = vunpack.c.l.b16 %v26
  %v44 = vunpack.c.l.b16 %v27
  %v45 = vunpack.c.l.b16 %v28
  %v46 = vunpack.c.l.b16 %v29
  %v47 = vunpack.c.l.b16 %v30
  %v48 = vunpack.c.l.b16 %v31
  %v49 = vunpack.c.l.b16 %v32
  %v50 = vunpack.c.l.b16 %v33
  %v51 = vpack.c.b16 %v44, %v43
  %v52 = vpack.c.b16 %v46, %v45
  %v53 = vpack.c.b16 %v48, %v47
  %v54 = vpack.c.b16 %v50, %v49
  %vm55 = vcmask 64512
  %v57 = vsel %vm55, %v51, 0
  %v60 = vsel %vm55, %v52, 0
  %v63 = vsel %vm55, %v53, 0
  %v66 = vsel %vm55, %v54, 0
  %vm68 = vcmask 1043456
  %v70 = vsel %vm68, %v34, 0
  %72 = vmatprep.subr.bf16.mxu0 0
  %73 = vmatpush1.bf16.msra.mxu0 %v70
  %74 = vmatprep.subr.bf16.mxu0 0
  %75 = vmatpush1.bf16.msra.mxu0 0
  %76 = vmatprep.subr.bf16.mxu0 0
  %77 = vmatpush1.bf16.msra.mxu0 0
  %78 = vmatprep.subr.bf16.mxu0 0
  %79 = vmatpush1.bf16.msra.mxu0 0
  %80 = vmatprep.subr.bf16.mxu0 0
  %81 = vmatpush1.bf16.msra.mxu0 0
  %82 = vmatprep.subr.bf16.mxu0 0
  %83 = vmatpush1.bf16.msra.mxu0 0
  %84 = vmatprep.subr.bf16.mxu0 0
  %85 = vmatpush1.bf16.msra.mxu0 0
  %86 = vmatprep.subr.bf16.mxu0 0
  %87 = vmatpush1.bf16.msra.mxu0 0
  %88 = vmatprep.subr.bf16.mxu0 0
  %89 = vmatpush1.bf16.msra.mxu0 0
  %90 = vmatprep.subr.bf16.mxu0 0
  %91 = vmatpush1.bf16.msra.mxu0 0
  %92 = vmatprep.subr.bf16.mxu0 0
  %93 = vmatpush1.bf16.msra.mxu0 0
  %94 = vmatprep.subr.bf16.mxu0 0
  %95 = vmatpush1.bf16.msra.mxu0 0
  %96 = vmatprep.subr.bf16.mxu0 0
  %97 = vmatpush1.bf16.msra.mxu0 0
  %98 = vmatprep.subr.bf16.mxu0 0
  %99 = vmatpush1.bf16.msra.mxu0 0
  %100 = vmatprep.subr.bf16.mxu0 0
  %101 = vmatpush1.bf16.msra.mxu0 0
  %102 = vmatprep.subr.bf16.mxu0 0
  %103 = vmatpush1.bf16.msra.mxu0 0
  %104 = vmatprep.mubr.bf16.mxu0 0
  %105 = vmatmul.mubr.bf16.gmra.mrb[0].mxu0 %v57
  %v106 = vpop.f32.mrb[0].mxu0
  %v107 = vadd.f32 0.0, %v106
  %v108 = vpop.f32.mrb[0].mxu0
  %v109 = vpop.f32.mrb[0].mxu0
  %v110 = vadd.f32 0.0, %v109
  %v111 = vpop.f32.mrb[0].mxu0
  %112 = vmatprep.mubr.bf16.mxu0 0
  %113 = vmatmul.mubr.bf16.gmra.mrb[0].mxu0 %v60
  %v114 = vpop.f32.mrb[0].mxu0
  %v115 = vadd.f32 0.0, %v114
  %v116 = vpop.f32.mrb[0].mxu0
  %v117 = vpop.f32.mrb[0].mxu0
  %v118 = vadd.f32 0.0, %v117
  %v119 = vpop.f32.mrb[0].mxu0
  %120 = vmatprep.mubr.bf16.mxu0 0
  %121 = vmatmul.mubr.bf16.gmra.mrb[0].mxu0 %v63
  %v122 = vpop.f32.mrb[0].mxu0
  %v123 = vadd.f32 0.0, %v122
  %v124 = vpop.f32.mrb[0].mxu0
  %v125 = vpop.f32.mrb[0].mxu0
  %v126 = vadd.f32 0.0, %v125
  %v127 = vpop.f32.mrb[0].mxu0
  %128 = vmatprep.mubr.bf16.mxu0 0
  %129 = vmatmul.mubr.bf16.gmra.mrb[0].mxu0 %v66
  %v130 = vpop.f32.mrb[0].mxu0
  %v131 = vadd.f32 0.0, %v130
  %v132 = vpop.f32.mrb[0].mxu0
  %v133 = vpop.f32.mrb[0].mxu0
  %v134 = vadd.f32 0.0, %v133
  %v135 = vpop.f32.mrb[0].mxu0
  %136 = vdwg.mxu0
  %v137 = vmax.f32 %v107, 0.0
  %v138 = vmax.f32 %v110, 0.0
  %v139 = vmax.f32 %v115, 0.0
  %v140 = vmax.f32 %v118, 0.0
  %v141 = vmax.f32 %v123, 0.0
  %v142 = vmax.f32 %v126, 0.0
  %v143 = vmax.f32 %v131, 0.0
  %v144 = vmax.f32 %v134, 0.0
  %v145 = vld [vmem:[%s2] sm:$0xf]
  %v146 = vld [vmem:[%s2 + $0x4] sm:$0xf]
  %v147 = vld [vmem:[%s2 + $0x8] sm:$0xf]
  %v148 = vld [vmem:[%s2 + $0xc] sm:$0xf]
  %v149 = vld [vmem:[%s2 + $0x10] sm:$0xf]
  %v150 = vld [vmem:[%s2 + $0x14] sm:$0xf]
  %v151 = vld [vmem:[%s2 + $0x18] sm:$0xf]
  %v152 = vld [vmem:[%s2 + $0x1c] sm:$0xf]
  %v153 = vld [vmem:[%s2 + $0x20] sm:$0xf]
  %v154 = vld [vmem:[%s2 + $0x24] sm:$0xf]
  %v155 = vld [vmem:[%s2 + $0x28] sm:$0xf]
  %v156 = vld [vmem:[%s2 + $0x2c] sm:$0xf]
  %v157 = vld [vmem:[%s2 + $0x30] sm:$0xf]
  %v158 = vld [vmem:[%s2 + $0x34] sm:$0xf]
  %v159 = vld [vmem:[%s2 + $0x38] sm:$0xf]
  %v160 = vld [vmem:[%s2 + $0x3c] sm:$0xf]
  %v161 = vpack.c.bf16 %v138, %v137
  %v162 = vpack.c.bf16 %v140, %v139
  %v163 = vpack.c.bf16 %v142, %v141
  %v164 = vpack.c.bf16 %v144, %v143
  %v165 = vld [vmem:[%s3] sm:$0xff]
  %v166 = vld [vmem:[%s3 + $0x8] sm:$0xff]
  %v167 = vld [vmem:[%s3 + $0x10] sm:$0xff]
  %v168 = vld [vmem:[%s3 + $0x18] sm:$0xff]
  %v169 = vld [vmem:[%s3 + $0x20] sm:$0xff]
  %v170 = vld [vmem:[%s3 + $0x28] sm:$0xff]
  %v171 = vld [vmem:[%s3 + $0x30] sm:$0xff]
  %v172 = vld [vmem:[%s3 + $0x38] sm:$0xff]
  %v173 = vld [vmem:[%s3 + $0x40] sm:$0xff]
  %v174 = vld [vmem:[%s3 + $0x48] sm:$0xff]
  %v175 = vld [vmem:[%s3 + $0x50] sm:$0xff]
  %v176 = vld [vmem:[%s3 + $0x58] sm:$0xff]
  %v177 = vld [vmem:[%s3 + $0x60] sm:$0xff]
  %v178 = vld [vmem:[%s3 + $0x68] sm:$0xff]
  %v179 = vld [vmem:[%s3 + $0x70] sm:$0xff]
  %v180 = vld [vmem:[%s3 + $0x78] sm:$0xff]
  %182 = vset.pattern.permute.xlu0 0
  %183 = vperm.xlu0 %182, %v165
  %v184 = vpop.permute.xlu0 %183
  %187 = vset.pattern.permute.xlu0 0
  %188 = vperm.xlu0 %187, %v166
  %v189 = vpop.permute.xlu0 %188
  %192 = vset.pattern.permute.xlu0 0
  %193 = vperm.xlu0 %192, %v167
  %v194 = vpop.permute.xlu0 %193
  %197 = vset.pattern.permute.xlu0 0
  %198 = vperm.xlu0 %197, %v168
  %v199 = vpop.permute.xlu0 %198
  %202 = vset.pattern.permute.xlu0 0
  %203 = vperm.xlu0 %202, %v169
  %v204 = vpop.permute.xlu0 %203
  %207 = vset.pattern.permute.xlu0 0
  %208 = vperm.xlu0 %207, %v170
  %v209 = vpop.permute.xlu0 %208
  %212 = vset.pattern.permute.xlu0 0
  %213 = vperm.xlu0 %212, %v171
  %v214 = vpop.permute.xlu0 %213
  %217 = vset.pattern.permute.xlu0 0
  %218 = vperm.xlu0 %217, %v172
  %v219 = vpop.permute.xlu0 %218
  %222 = vset.pattern.permute.xlu0 0
  %223 = vperm.xlu0 %222, %v173
  %v224 = vpop.permute.xlu0 %223
  %227 = vset.pattern.permute.xlu0 0
  %228 = vperm.xlu0 %227, %v174
  %v229 = vpop.permute.xlu0 %228
  %232 = vset.pattern.permute.xlu0 0
  %233 = vperm.xlu0 %232, %v175
  %v234 = vpop.permute.xlu0 %233
  %237 = vset.pattern.permute.xlu0 0
  %238 = vperm.xlu0 %237, %v176
  %v239 = vpop.permute.xlu0 %238
  %242 = vset.pattern.permute.xlu0 0
  %243 = vperm.xlu0 %242, %v177
  %v244 = vpop.permute.xlu0 %243
  %247 = vset.pattern.permute.xlu0 0
  %248 = vperm.xlu0 %247, %v178
  %v249 = vpop.permute.xlu0 %248
  %252 = vset.pattern.permute.xlu0 0
  %253 = vperm.xlu0 %252, %v179
  %v254 = vpop.permute.xlu0 %253
  %257 = vset.pattern.permute.xlu0 0
  %258 = vperm.xlu0 %257, %v180
  %v259 = vpop.permute.xlu0 %258
  %v277 = vunpack.c.l.b16 %v145
  %v278 = vunpack.c.l.b16 %v146
  %v279 = vunpack.c.l.b16 %v147
  %v280 = vunpack.c.l.b16 %v148
  %v281 = vunpack.c.l.b16 %v149
  %v282 = vunpack.c.l.b16 %v150
  %v283 = vunpack.c.l.b16 %v151
  %v284 = vunpack.c.l.b16 %v152
  %v285 = vunpack.c.l.b16 %v153
  %v286 = vunpack.c.l.b16 %v154
  %v287 = vunpack.c.l.b16 %v155
  %v288 = vunpack.c.l.b16 %v156
  %v289 = vunpack.c.l.b16 %v157
  %v290 = vunpack.c.l.b16 %v158
  %v291 = vunpack.c.l.b16 %v159
  %v292 = vunpack.c.l.b16 %v160
  %v293 = vpack.c.b16 %v278, %v277
  %v294 = vpack.c.b16 %v280, %v279
  %v295 = vpack.c.b16 %v282, %v281
  %v296 = vpack.c.b16 %v284, %v283
  %v297 = vpack.c.b16 %v286, %v285
  %v298 = vpack.c.b16 %v288, %v287
  %v299 = vpack.c.b16 %v290, %v289
  %v300 = vpack.c.b16 %v292, %v291
  %vm301 = vcmask 523264
  %v303 = vsel %vm301, %v293, 0
  %v306 = vsel %vm301, %v294, 0
  %v309 = vsel %vm301, %v295, 0
  %v312 = vsel %vm301, %v296, 0
  %v315 = vsel %vm301, %v297, 0
  %v318 = vsel %vm301, %v298, 0
  %v321 = vsel %vm301, %v299, 0
  %v324 = vsel %vm301, %v300, 0
  %326 = vmatprep.subr.bf16.mxu0 0
  %327 = vmatpush1.bf16.msra.mxu0 %v161
  %328 = vmatprep.subr.bf16.mxu0 0
  %329 = vmatpush1.bf16.msra.mxu0 %v162
  %330 = vmatprep.subr.bf16.mxu0 0
  %331 = vmatpush1.bf16.msra.mxu0 %v163
  %332 = vmatprep.subr.bf16.mxu0 0
  %333 = vmatpush1.bf16.msra.mxu0 %v164
  %334 = vmatprep.subr.bf16.mxu0 0
  %335 = vmatpush1.bf16.msra.mxu0 0
  %336 = vmatprep.subr.bf16.mxu0 0
  %337 = vmatpush1.bf16.msra.mxu0 0
  %338 = vmatprep.subr.bf16.mxu0 0
  %339 = vmatpush1.bf16.msra.mxu0 0
  %340 = vmatprep.subr.bf16.mxu0 0
  %341 = vmatpush1.bf16.msra.mxu0 0
  %342 = vmatprep.subr.bf16.mxu0 0
  %343 = vmatpush1.bf16.msra.mxu0 0
  %344 = vmatprep.subr.bf16.mxu0 0
  %345 = vmatpush1.bf16.msra.mxu0 0
  %346 = vmatprep.subr.bf16.mxu0 0
  %347 = vmatpush1.bf16.msra.mxu0 0
  %348 = vmatprep.subr.bf16.mxu0 0
  %349 = vmatpush1.bf16.msra.mxu0 0
  %350 = vmatprep.subr.bf16.mxu0 0
  %351 = vmatpush1.bf16.msra.mxu0 0
  %352 = vmatprep.subr.bf16.mxu0 0
  %353 = vmatpush1.bf16.msra.mxu0 0
  %354 = vmatprep.subr.bf16.mxu0 0
  %355 = vmatpush1.bf16.msra.mxu0 0
  %356 = vmatprep.subr.bf16.mxu0 0
  %357 = vmatpush1.bf16.msra.mxu0 0
  %358 = vmatprep.mubr.bf16.mxu0 0
  %359 = vmatmul.mubr.bf16.gmra.mrb[0].mxu0 %v303
  %v360 = vpop.f32.mrb[0].mxu0
  %v361 = vadd.f32 %v184, %v360
  %v362 = vpop.f32.mrb[0].mxu0
  %v363 = vpop.f32.mrb[0].mxu0
  %v364 = vadd.f32 %v189, %v363
  %v365 = vpop.f32.mrb[0].mxu0
  %366 = vmatprep.mubr.bf16.mxu0 0
  %367 = vmatmul.mubr.bf16.gmra.mrb[0].mxu0 %v306
  %v368 = vpop.f32.mrb[0].mxu0
  %v369 = vadd.f32 %v194, %v368
  %v370 = vpop.f32.mrb[0].mxu0
  %v371 = vpop.f32.mrb[0].mxu0
  %v372 = vadd.f32 %v199, %v371
  %v373 = vpop.f32.mrb[0].mxu0
  %374 = vmatprep.mubr.bf16.mxu0 0
  %375 = vmatmul.mubr.bf16.gmra.mrb[0].mxu0 %v309
  %v376 = vpop.f32.mrb[0].mxu0
  %v377 = vadd.f32 %v204, %v376
  %v378 = vpop.f32.mrb[0].mxu0
  %v379 = vpop.f32.mrb[0].mxu0
  %v380 = vadd.f32 %v209, %v379
  %v381 = vpop.f32.mrb[0].mxu0
  %382 = vmatprep.mubr.bf16.mxu0 0
  %383 = vmatmul.mubr.bf16.gmra.mrb[0].mxu0 %v312
  %v384 = vpop.f32.mrb[0].mxu0
  %v385 = vadd.f32 %v214, %v384
  %v386 = vpop.f32.mrb[0].mxu0
  %v387 = vpop.f32.mrb[0].mxu0
  %v388 = vadd.f32 %v219, %v387
  %v389 = vpop.f32.mrb[0].mxu0
  %390 = vmatprep.mubr.bf16.mxu0 0
  %391 = vmatmul.mubr.bf16.gmra.mrb[0].mxu0 %v315
  %v392 = vpop.f32.mrb[0].mxu0
  %v393 = vadd.f32 %v224, %v392
  %v394 = vpop.f32.mrb[0].mxu0
  %v395 = vpop.f32.mrb[0].mxu0
  %v396 = vadd.f32 %v229, %v395
  %v397 = vpop.f32.mrb[0].mxu0
  %398 = vmatprep.mubr.bf16.mxu0 0
  %399 = vmatmul.mubr.bf16.gmra.mrb[0].mxu0 %v318
  %v400 = vpop.f32.mrb[0].mxu0
  %v401 = vadd.f32 %v234, %v400
  %v402 = vpop.f32.mrb[0].mxu0
  %v403 = vpop.f32.mrb[0].mxu0
  %v404 = vadd.f32 %v239, %v403
  %v405 = vpop.f32.mrb[0].mxu0
  %406 = vmatprep.mubr.bf16.mxu0 0
  %407 = vmatmul.mubr.bf16.gmra.mrb[0].mxu0 %v321
  %v408 = vpop.f32.mrb[0].mxu0
  %v409 = vadd.f32 %v244, %v408
  %v410 = vpop.f32.mrb[0].mxu0
  %v411 = vpop.f32.mrb[0].mxu0
  %v412 = vadd.f32 %v249, %v411
  %v413 = vpop.f32.mrb[0].mxu0
  %414 = vmatprep.mubr.bf16.mxu0 0
  %415 = vmatmul.mubr.bf16.gmra.mrb[0].mxu0 %v324
  %v416 = vpop.f32.mrb[0].mxu0
  %v417 = vadd.f32 %v254, %v416
  %v418 = vpop.f32.mrb[0].mxu0
  %v419 = vpop.f32.mrb[0].mxu0
  %v420 = vadd.f32 %v259, %v419
  %v421 = vpop.f32.mrb[0].mxu0
  %422 = vdwg.mxu0
  %v423 = vmax.f32 %v361, 0.0
  %v424 = vmax.f32 %v364, 0.0
  %v425 = vmax.f32 %v369, 0.0
  %v426 = vmax.f32 %v372, 0.0
  %v427 = vmax.f32 %v377, 0.0
  %v428 = vmax.f32 %v380, 0.0
  %v429 = vmax.f32 %v385, 0.0
  %v430 = vmax.f32 %v388, 0.0
  %v431 = vmax.f32 %v393, 0.0
  %v432 = vmax.f32 %v396, 0.0
  %v433 = vmax.f32 %v401, 0.0
  %v434 = vmax.f32 %v404, 0.0
  %v435 = vmax.f32 %v409, 0.0
  %v436 = vmax.f32 %v412, 0.0
  %v437 = vmax.f32 %v417, 0.0
  %v438 = vmax.f32 %v420, 0.0
  %v439 = vld [vmem:[%s4] sm:$0xff]
  %v440 = vld [vmem:[%s4 + $0x8] sm:$0xff]
  %v441 = vld [vmem:[%s4 + $0x10] sm:$0xff]
  %v442 = vld [vmem:[%s4 + $0x18] sm:$0xff]
  %v443 = vld [vmem:[%s4 + $0x20] sm:$0xff]
  %v444 = vld [vmem:[%s4 + $0x28] sm:$0xff]
  %v445 = vld [vmem:[%s4 + $0x30] sm:$0xff]
  %v446 = vld [vmem:[%s4 + $0x38] sm:$0xff]
  %v447 = vld [vmem:[%s4 + $0x40] sm:$0xff]
  %v448 = vld [vmem:[%s4 + $0x48] sm:$0xff]
  %v449 = vld [vmem:[%s4 + $0x50] sm:$0xff]
  %v450 = vld [vmem:[%s4 + $0x58] sm:$0xff]
  %v451 = vld [vmem:[%s4 + $0x60] sm:$0xff]
  %v452 = vld [vmem:[%s4 + $0x68] sm:$0xff]
  %v453 = vld [vmem:[%s4 + $0x70] sm:$0xff]
  %v454 = vld [vmem:[%s4 + $0x78] sm:$0xff]
  %456 = vset.pattern.permute.xlu0 0
  %457 = vperm.xlu0 %456, %v439
  %v458 = vpop.permute.xlu0 %457
  %461 = vset.pattern.permute.xlu0 0
  %462 = vperm.xlu0 %461, %v440
  %v463 = vpop.permute.xlu0 %462
  %466 = vset.pattern.permute.xlu0 0
  %467 = vperm.xlu0 %466, %v441
  %v468 = vpop.permute.xlu0 %467
  %471 = vset.pattern.permute.xlu0 0
  %472 = vperm.xlu0 %471, %v442
  %v473 = vpop.permute.xlu0 %472
  %476 = vset.pattern.permute.xlu0 0
  %477 = vperm.xlu0 %476, %v443
  %v478 = vpop.permute.xlu0 %477
  %481 = vset.pattern.permute.xlu0 0
  %482 = vperm.xlu0 %481, %v444
  %v483 = vpop.permute.xlu0 %482
  %486 = vset.pattern.permute.xlu0 0
  %487 = vperm.xlu0 %486, %v445
  %v488 = vpop.permute.xlu0 %487
  %491 = vset.pattern.permute.xlu0 0
  %492 = vperm.xlu0 %491, %v446
  %v493 = vpop.permute.xlu0 %492
  %496 = vset.pattern.permute.xlu0 0
  %497 = vperm.xlu0 %496, %v447
  %v498 = vpop.permute.xlu0 %497
  %501 = vset.pattern.permute.xlu0 0
  %502 = vperm.xlu0 %501, %v448
  %v503 = vpop.permute.xlu0 %502
  %506 = vset.pattern.permute.xlu0 0
  %507 = vperm.xlu0 %506, %v449
  %v508 = vpop.permute.xlu0 %507
  %511 = vset.pattern.permute.xlu0 0
  %512 = vperm.xlu0 %511, %v450
  %v513 = vpop.permute.xlu0 %512
  %516 = vset.pattern.permute.xlu0 0
  %517 = vperm.xlu0 %516, %v451
  %v518 = vpop.permute.xlu0 %517
  %521 = vset.pattern.permute.xlu0 0
  %522 = vperm.xlu0 %521, %v452
  %v523 = vpop.permute.xlu0 %522
  %526 = vset.pattern.permute.xlu0 0
  %527 = vperm.xlu0 %526, %v453
  %v528 = vpop.permute.xlu0 %527
  %531 = vset.pattern.permute.xlu0 0
  %532 = vperm.xlu0 %531, %v454
  %v533 = vpop.permute.xlu0 %532
  %v535 = vmul.f32 %v423, %v458
  %v536 = vmul.f32 %v424, %v463
  %v537 = vmul.f32 %v425, %v468
  %v538 = vmul.f32 %v426, %v473
  %v539 = vmul.f32 %v427, %v478
  %v540 = vmul.f32 %v428, %v483
  %v541 = vmul.f32 %v429, %v488
  %v542 = vmul.f32 %v430, %v493
  %v543 = vmul.f32 %v431, %v498
  %v544 = vmul.f32 %v432, %v503
  %v545 = vmul.f32 %v433, %v508
  %v546 = vmul.f32 %v434, %v513
  %v547 = vmul.f32 %v435, %v518
  %v548 = vmul.f32 %v436, %v523
  %v549 = vmul.f32 %v437, %v528
  %v550 = vmul.f32 %v438, %v533
  %v551 = vadd.f32 %v535, %v536
  %v552 = vadd.f32 %v551, %v537
  %v553 = vadd.f32 %v552, %v538
  %v554 = vadd.f32 %v553, %v539
  %v555 = vadd.f32 %v554, %v540
  %v556 = vadd.f32 %v555, %v541
  %v557 = vadd.f32 %v556, %v542
  %v558 = vadd.f32 %v557, %v543
  %v559 = vadd.f32 %v558, %v544
  %v560 = vadd.f32 %v559, %v545
  %v561 = vadd.f32 %v560, %v546
  %v562 = vadd.f32 %v561, %v547
  %v563 = vadd.f32 %v562, %v548
  %v564 = vadd.f32 %v563, %v549
  %v565 = vadd.f32 %v564, %v550
  %v566 = vrot.slane %v565, 4
  %v567 = vadd.f32 %v565, %v566
  %v568 = vrot.slane %v567, 2
  %v569 = vadd.f32 %v567, %v568
  %v570 = vrot.slane %v569, 1
  %v571 = vadd.f32 %v569, %v570
  %v572 = vld [vmem:[#allocation2] sm:$0x1]
  %574 = vset.pattern.permute.xlu0 0
  %575 = vperm.xlu0 %574, %v572
  %v576 = vpop.permute.xlu0 %575
  %v578 = vlaneseq
  %v579 = vshrl.u32 %v578, 7
  %v580 = vsub.s32 0, %v579
  %v581 = vrot.slane %v576, %v580
  %v582 = vadd.f32 %v571, %v581
  %583 = vst [vmem:[%s6] sm:$0x1] %v582
  // Predicated region
  $region26: #{biasnet_forward.1} parent=0 // pred_check
    _
  $region27: #{biasnet_forward.1} parent=0 // pred_check_branch
    %585 = sbr.rel (0) target = $region29
  $region28: #{biasnet_forward.1} parent=0 // pred_region
    _
  $region29: #{biasnet_forward.1} parent=0 // pred_fallthru
    _
  // Predicated region
  $region30: #{biasnet_forward.1} parent=0 // pred_check
    _
  $region31: #{biasnet_forward.1} parent=0 // pred_check_branch
    %587 = sbr.rel (0) target = $region33
  $region32: #{biasnet_forward.1} parent=0 // pred_region
    _
  $region33: #{biasnet_forward.1} parent=0 // pred_fallthru
    _

</llo_original>
